<compile_context>
chip_gen: v6e
topology: v6e:2x2x1
jax: 0.10.0
libtpu: 0.0.40
codegen_flags: <defaults>
</compile_context>

<pallas_src>
import jax
import jax.numpy as jnp
from jax.experimental import pallas as pl
from jax.experimental.pallas import tpu as pltpu


LN_EPS = 1e-5
_VMEM_BUDGET = 32 * 1024 * 1024     # per-step budget, safe on v7x (64 MiB physical)


def _round_up(a, b):
    return (a + b - 1) // b * b


def _layernorm_f32(x, gamma, beta):
    """Two-pass LayerNorm (numerically stable), f32 math, EUP rsqrt."""
    mean = jnp.mean(x, axis=-1, keepdims=True)
    xc = x - mean
    var = jnp.mean(xc * xc, axis=-1, keepdims=True)
    return xc * jax.lax.rsqrt(var + LN_EPS) * gamma + beta


# ----------------------------------------------------------------------------
# Kernel 1: weights fully VMEM-resident (tk == H).  Grid = (row tiles,).
# ----------------------------------------------------------------------------
def mlp_fused_kernel(x_ref, w0_ref, b0_ref, w1_ref, b1_ref, gamma_ref, beta_ref,
                     o_ref):
    x = x_ref[...].astype(jnp.float32)                                  # (tm, D)
    xn = _layernorm_f32(x, gamma_ref[...], beta_ref[...]).astype(jnp.bfloat16)
    h = jnp.dot(xn, w0_ref[...], preferred_element_type=jnp.float32)   # (tm, H)
    # fc0 epilogue in bf16: the second dot consumes bf16 anyway (keep f32 on
    # v5e if it ever becomes the binding VALU slot there).
    h = jnp.maximum(h.astype(jnp.bfloat16) + b0_ref[...], 0)
    y = jnp.dot(h, w1_ref[...], preferred_element_type=jnp.float32)    # (tm, D)
    o_ref[...] = (x + y + b1_ref[...]).astype(o_ref.dtype)


# ----------------------------------------------------------------------------
# Kernel 2: hidden-dim reduction over k (for H too large to keep resident).
# Grid = (row tiles, H // tk), k axis "arbitrary".
# ----------------------------------------------------------------------------
def make_mlp_tiled_kernel(acc_in_out):
    def kernel(x_ref, w0_ref, b0_ref, w1_ref, b1_ref, gamma_ref, beta_ref,
               o_ref, xn_ref, *maybe_acc):
        acc_ref = o_ref if acc_in_out else maybe_acc[0]
        k = pl.program_id(1)

        @pl.when(k == 0)
        def _init():
            x = x_ref[...].astype(jnp.float32)
            xn_ref[...] = _layernorm_f32(
                x, gamma_ref[...], beta_ref[...]).astype(jnp.bfloat16)
            acc_ref[...] = jnp.zeros_like(acc_ref)

        # fc0 column tile (tm, D) @ (D, tk) on the MXU, f32 accumulation.
        h = jnp.dot(xn_ref[...], w0_ref[...], preferred_element_type=jnp.float32)
        h = jnp.maximum(h.astype(jnp.bfloat16) + b0_ref[...], 0)
        # fc1 partial (tm, tk) @ (tk, D) accumulated into the resident out/acc.
        acc_ref[...] += jnp.dot(h, w1_ref[...], preferred_element_type=jnp.float32)

        @pl.when(k == pl.num_programs(1) - 1)
        def _finalize():
            y = acc_ref[...] + b1_ref[...]
            o_ref[...] = (x_ref[...].astype(jnp.float32) + y).astype(o_ref.dtype)

    return kernel


# ----------------------------------------------------------------------------
# Wrapper
# ----------------------------------------------------------------------------
def mlp_forward(x, w0_t, b0, w1_t, b1, gamma, beta, *, tm=None, tk=None):
    """x: [N, D]; w0_t: [D, H] (pre-transposed); b0: [H]; w1_t: [H, D]; b1: [D]."""
    N, D = x.shape
    H = w0_t.shape[1]
    assert w0_t.shape == (D, H) and w1_t.shape == (H, D)
    assert b0.shape == (H,) and b1.shape == (D,)
    assert gamma.shape == (D,) and beta.shape == (D,)

    x_item = jnp.dtype(x.dtype).itemsize
    out_is_f32 = jnp.dtype(x.dtype) == jnp.float32

    # --- hidden tile: collapse the reduction when bf16 weights fit VMEM -------
    if tk is None:
        if (2 * D * H) * 2 <= 4 * 1024 * 1024:       # w0 + w1 in bf16
            tk = H
        else:
            tk = next((c for c in (512, 384, 256, 128) if H % c == 0), H)
    tk = min(tk, H)
    num_k = H // tk
    if num_k > 1:
        assert H % tk == 0 and tk % 128 == 0, "hidden tile must divide H, 128-multiple"
    wbuf = 3 if num_k >= 4 else 2        # deeper buffering for many short k steps

    def vmem_need(tm_):
        fixed = 2 * (H * 2 + 3 * D * 4)                      # biases + LN params
        io = 2 * tm_ * D * 2 * x_item                        # x + out, double-buffered
        if num_k == 1:
            return io + fixed + 2 * (2 * D * H) * 2          # resident bf16 weights
        w = wbuf * (2 * D * tk) * 2                          # streamed bf16 weight tiles
        scratch = tm_ * D * 2 + (0 if out_is_f32 else tm_ * D * 4)
        return io + fixed + w + scratch

    # --- row tile: prefer 256-multiples (full MXU pass), fit VMEM budget ------
    if tm is None:
        cands = [c for c in (1024, 768, 512, 256, 128, 64, 32, 16, 8) if c <= max(N, 8)]
        tm = next((c for c in cands if vmem_need(c) <= _VMEM_BUDGET), 8)
    tm = _round_up(max(8, min(tm, _round_up(N, 8))), 8)
    n_pad = _round_up(N, tm)

    x_in = x if n_pad == N else jnp.pad(x, ((0, n_pad - N), (0, 0)))

    # Weights streamed/held in bf16 (half the HBM/VMEM traffic, bf16 MXU peak).
    w0_bf = w0_t.astype(jnp.bfloat16)
    w1_bf = w1_t.astype(jnp.bfloat16)
    b0_2d = b0.reshape(1, H).astype(jnp.bfloat16)    # bf16 fc0 epilogue
    b1_2d = b1.reshape(1, D).astype(jnp.float32)
    g_2d = gamma.reshape(1, D).astype(jnp.float32)
    be_2d = beta.reshape(1, D).astype(jnp.float32)

    # Honest cost estimate: weights are re-streamed once per row tile unless the
    # reduction is collapsed (constant index map -> fetched exactly once).
    weight_passes = 1 if num_k == 1 else (n_pad // tm)
    bytes_accessed = (n_pad * D * 2 * x_item
                      + weight_passes * (2 * D * H) * 2
                      + H * 2 + 3 * D * 4)
    cost = pl.CostEstimate(flops=4 * n_pad * D * H,
                           transcendentals=n_pad,
                           bytes_accessed=int(bytes_accessed))

    if num_k == 1:
        kernel = mlp_fused_kernel
        grid = (n_pad // tm,)
        in_specs = [
            pl.BlockSpec((tm, D), lambda i: (i, 0)),   # x row tile
            pl.BlockSpec((D, H), lambda i: (0, 0)),    # fc0 weight (resident)
            pl.BlockSpec((1, H), lambda i: (0, 0)),    # fc0 bias
            pl.BlockSpec((H, D), lambda i: (0, 0)),    # fc1 weight (resident)
            pl.BlockSpec((1, D), lambda i: (0, 0)),    # fc1 bias
            pl.BlockSpec((1, D), lambda i: (0, 0)),    # LN gamma
            pl.BlockSpec((1, D), lambda i: (0, 0)),    # LN beta
        ]
        out_specs = pl.BlockSpec((tm, D), lambda i: (i, 0))
        scratch = []
        dim_sem = ("parallel",)
    else:
        kernel = make_mlp_tiled_kernel(out_is_f32)
        grid = (n_pad // tm, num_k)                    # reduction axis last
        wkw = {"pipeline_mode": pl.Buffered(wbuf)} if wbuf != 2 else {}
        in_specs = [
            pl.BlockSpec((tm, D), lambda i, k: (i, 0)),
            pl.BlockSpec((D, tk), lambda i, k: (0, k), **wkw),
            pl.BlockSpec((1, tk), lambda i, k: (0, k)),
            pl.BlockSpec((tk, D), lambda i, k: (k, 0), **wkw),
            pl.BlockSpec((1, D), lambda i, k: (0, 0)),
            pl.BlockSpec((1, D), lambda i, k: (0, 0)),
            pl.BlockSpec((1, D), lambda i, k: (0, 0)),
        ]
        out_specs = pl.BlockSpec((tm, D), lambda i, k: (i, 0))
        scratch = [pltpu.VMEM((tm, D), jnp.bfloat16)]          # cached LN(x)
        if not out_is_f32:
            scratch.append(pltpu.VMEM((tm, D), jnp.float32))   # f32 accumulator
        dim_sem = ("parallel", "arbitrary")

    # Computed VMEM limit (+headroom), never the full physical VMEM of a v7x TC.
    vmem_limit = min(48 * 1024 * 1024,
                     max(16 * 1024 * 1024, int(vmem_need(tm) * 1.3)))

    out = pl.pallas_call(
        kernel,
        out_shape=jax.ShapeDtypeStruct((n_pad, D), x.dtype),
        grid_spec=pltpu.PrefetchScalarGridSpec(
            num_scalar_prefetch=0,
            grid=grid,
            in_specs=in_specs,
            out_specs=out_specs,
            scratch_shapes=scratch,
        ),
        compiler_params=pltpu.CompilerParams(
            dimension_semantics=dim_sem,
            vmem_limit_bytes=vmem_limit,
        ),
        cost_estimate=cost,
    )(x_in, w0_bf, b0_2d, w1_bf, b1_2d, g_2d, be_2d)

    return out if n_pad == N else out[:N]


# ----------------------------------------------------------------------------
# Reference + init helpers
# ----------------------------------------------------------------------------
def xavier_uniform(key, fan_out, fan_in, dtype=jnp.float32):
    """Matches nn.init.xavier_uniform_ for an [out, in] Linear weight."""
    limit = (6.0 / (fan_in + fan_out)) ** 0.5
    return jax.random.uniform(key, (fan_out, fan_in), dtype, minval=-limit, maxval=limit)


def reference_mlp(x, w0, b0, w1, b1, gamma, beta):
    """Pure-JAX f32 reference matching PyTorch semantics (weights [out, in])."""
    mean = jnp.mean(x, axis=-1, keepdims=True)
    var = jnp.mean((x - mean) ** 2, axis=-1, keepdims=True)
    xn = (x - mean) / jnp.sqrt(var + LN_EPS) * gamma + beta
    h = jnp.maximum(xn @ w0.T + b0, 0.0)
    return x + (h @ w1.T + b1)


if __name__ == "__main__":
    key = jax.random.PRNGKey(0)
    # Small but lane-dense shapes implied by Mlp(node_in_feats):
    #   N=256 nodes, D=128 node feats, H=2*D=256 hidden.
    # The auto-tiler collapses this to a single grid step (tm=N, tk=H) with
    # VMEM-resident weights.
    N, D = 256, 128
    H = 2 * D

    k_x, k_w0, k_b0, k_w1, k_b1 = jax.random.split(key, 5)

    x = jax.random.normal(k_x, (N, D), jnp.float32)

    # fc0: Linear(D, 2D) -> weight [2D, D], bias [2D]
    w0 = xavier_uniform(k_w0, H, D)
    b0 = jax.random.uniform(k_b0, (H,), jnp.float32,
                            minval=-1.0 / (D ** 0.5), maxval=1.0 / (D ** 0.5))
    # fc1: Linear(2D, D) -> weight [D, 2D], bias [D]
    w1 = xavier_uniform(k_w1, D, H)
    b1 = jax.random.uniform(k_b1, (D,), jnp.float32,
                            minval=-1.0 / (H ** 0.5), maxval=1.0 / (H ** 0.5))
    # LayerNorm(D): default affine weight=1, bias=0
    gamma = jnp.ones((D,), jnp.float32)
    beta = jnp.zeros((D,), jnp.float32)

    out = mlp_forward(x, w0.T, b0, w1.T, b1, gamma, beta)
    out = jax.block_until_ready(out)

    ref = reference_mlp(x, w0, b0, w1, b1, gamma, beta)
    assert out.shape == (N, D)
    # bf16 MXU operands / bf16 epilogue with f32 accumulation -> loosened tol.
    max_err = float(jnp.max(jnp.abs(out - ref)))
    assert jnp.allclose(out, ref, atol=5e-2, rtol=5e-2), f"mismatch (max err {max_err})"

    print("KERNEL_OK")
</pallas_src>

<mosaic_0001>
module attributes {stable_mosaic.version = 11 : i64} {
  func.func @mlp_fused_kernel(%arg0: i32, %arg1: memref<256x128xf32, #tpu.memory_space<vmem>>, %arg2: memref<128x256xbf16, #tpu.memory_space<vmem>>, %arg3: memref<1x256xbf16, #tpu.memory_space<vmem>>, %arg4: memref<256x128xbf16, #tpu.memory_space<vmem>>, %arg5: memref<1x128xf32, #tpu.memory_space<vmem>>, %arg6: memref<1x128xf32, #tpu.memory_space<vmem>>, %arg7: memref<1x128xf32, #tpu.memory_space<vmem>>, %arg8: memref<256x128xf32, #tpu.memory_space<vmem>>) attributes {dimension_semantics = [#tpu.dimension_semantics<parallel>], iteration_bounds = array<i64: 1>, scalar_prefetch = 0 : i64, scratch_operands = 0 : i64, tpu.core_type = #tpu.core_type<tc>, window_params = [{transform_indices = @transform_0, window_bounds = array<i64: 256, 128>}, {pipeline_mode = #tpu.pipeline_mode<synchronous>, transform_indices = @transform_1, window_bounds = array<i64: 128, 256>}, {pipeline_mode = #tpu.pipeline_mode<synchronous>, transform_indices = @transform_2, window_bounds = array<i64: 1, 256>}, {pipeline_mode = #tpu.pipeline_mode<synchronous>, transform_indices = @transform_3, window_bounds = array<i64: 256, 128>}, {pipeline_mode = #tpu.pipeline_mode<synchronous>, transform_indices = @transform_4, window_bounds = array<i64: 1, 128>}, {pipeline_mode = #tpu.pipeline_mode<synchronous>, transform_indices = @transform_5, window_bounds = array<i64: 1, 128>}, {pipeline_mode = #tpu.pipeline_mode<synchronous>, transform_indices = @transform_6, window_bounds = array<i64: 1, 128>}, {transform_indices = @transform_7, window_bounds = array<i64: 256, 128>}]} {
    %c0 = arith.constant 0 : index
    %c0_0 = arith.constant 0 : index
    %0 = vector.load %arg1[%c0, %c0_0] : memref<256x128xf32, #tpu.memory_space<vmem>>, vector<256x128xf32>
    %c0_1 = arith.constant 0 : index
    %c0_2 = arith.constant 0 : index
    %1 = vector.load %arg6[%c0_1, %c0_2] : memref<1x128xf32, #tpu.memory_space<vmem>>, vector<1x128xf32>
    %c0_3 = arith.constant 0 : index
    %c0_4 = arith.constant 0 : index
    %2 = vector.load %arg7[%c0_3, %c0_4] : memref<1x128xf32, #tpu.memory_space<vmem>>, vector<1x128xf32>
    %cst = arith.constant dense<0.000000e+00> : vector<256xf32>
    %3 = vector.multi_reduction <add>, %0, %cst [1] : vector<256x128xf32> to vector<256xf32>
    %4 = vector.shape_cast %3 : vector<256xf32> to vector<256x1xf32>
    %cst_5 = arith.constant 1.280000e+02 : f32
    %5 = vector.broadcast %cst_5 : f32 to vector<256x1xf32>
    %6 = arith.divf %4, %5 : vector<256x1xf32>
    %7 = vector.broadcast %6 : vector<256x1xf32> to vector<256x128xf32>
    %8 = arith.subf %0, %7 : vector<256x128xf32>
    %9 = arith.mulf %8, %8 : vector<256x128xf32>
    %cst_6 = arith.constant dense<0.000000e+00> : vector<256xf32>
    %10 = vector.multi_reduction <add>, %9, %cst_6 [1] : vector<256x128xf32> to vector<256xf32>
    %11 = vector.shape_cast %10 : vector<256xf32> to vector<256x1xf32>
    %cst_7 = arith.constant 1.280000e+02 : f32
    %12 = vector.broadcast %cst_7 : f32 to vector<256x1xf32>
    %13 = arith.divf %11, %12 : vector<256x1xf32>
    %cst_8 = arith.constant 9.99999974E-6 : f32
    %14 = vector.broadcast %cst_8 : f32 to vector<256x1xf32>
    %15 = arith.addf %13, %14 : vector<256x1xf32>
    %16 = math.rsqrt %15 : vector<256x1xf32>
    %17 = vector.broadcast %16 : vector<256x1xf32> to vector<256x128xf32>
    %18 = arith.mulf %8, %17 : vector<256x128xf32>
    %19 = vector.broadcast %1 : vector<1x128xf32> to vector<256x128xf32>
    %20 = arith.mulf %18, %19 : vector<256x128xf32>
    %21 = vector.broadcast %2 : vector<1x128xf32> to vector<256x128xf32>
    %22 = arith.addf %20, %21 : vector<256x128xf32>
    %23 = arith.truncf %22 : vector<256x128xf32> to vector<256x128xbf16>
    %c0_9 = arith.constant 0 : index
    %c0_10 = arith.constant 0 : index
    %24 = vector.load %arg2[%c0_9, %c0_10] : memref<128x256xbf16, #tpu.memory_space<vmem>>, vector<128x256xbf16>
    %cst_11 = arith.constant dense<0.000000e+00> : vector<256x256xf32>
    %25 = tpu.matmul %23, %24, %cst_11 {dimension_numbers = #tpu.dot_dimension_numbers<[1], [0], [0], [1], [0, 0, 1, 1], [], []>} : vector<256x128xbf16>, vector<128x256xbf16>, vector<256x256xf32> -> vector<256x256xf32>
    %26 = arith.truncf %25 : vector<256x256xf32> to vector<256x256xbf16>
    %c0_12 = arith.constant 0 : index
    %c0_13 = arith.constant 0 : index
    %27 = vector.load %arg3[%c0_12, %c0_13] : memref<1x256xbf16, #tpu.memory_space<vmem>>, vector<1x256xbf16>
    %28 = vector.broadcast %27 : vector<1x256xbf16> to vector<256x256xbf16>
    %29 = arith.addf %26, %28 : vector<256x256xbf16>
    %cst_14 = arith.constant 0.000000e+00 : bf16
    %30 = vector.broadcast %cst_14 : bf16 to vector<256x256xbf16>
    %31 = arith.maximumf %29, %30 : vector<256x256xbf16>
    %c0_15 = arith.constant 0 : index
    %c0_16 = arith.constant 0 : index
    %32 = vector.load %arg4[%c0_15, %c0_16] : memref<256x128xbf16, #tpu.memory_space<vmem>>, vector<256x128xbf16>
    %cst_17 = arith.constant dense<0.000000e+00> : vector<256x128xf32>
    %33 = tpu.matmul %31, %32, %cst_17 {dimension_numbers = #tpu.dot_dimension_numbers<[1], [0], [0], [1], [0, 0, 1, 1], [], []>} : vector<256x256xbf16>, vector<256x128xbf16>, vector<256x128xf32> -> vector<256x128xf32>
    %34 = arith.addf %0, %33 : vector<256x128xf32>
    %c0_18 = arith.constant 0 : index
    %c0_19 = arith.constant 0 : index
    %35 = vector.load %arg5[%c0_18, %c0_19] : memref<1x128xf32, #tpu.memory_space<vmem>>, vector<1x128xf32>
    %36 = vector.broadcast %35 : vector<1x128xf32> to vector<256x128xf32>
    %37 = arith.addf %34, %36 : vector<256x128xf32>
    %c0_20 = arith.constant 0 : index
    %c0_21 = arith.constant 0 : index
    %38 = vector.load %arg8[%c0_20, %c0_21] : memref<256x128xf32, #tpu.memory_space<vmem>>, vector<256x128xf32>
    tpu.vector_store %arg8[%c0_20, %c0_21], %37 {strides = array<i32>} : memref<256x128xf32, #tpu.memory_space<vmem>>, vector<256x128xf32>,
    return
  }
  func.func @transform_0(%arg0: i32) -> (i32, i32) {
    %c0_i32 = arith.constant 0 : i32
    %c0_i32_0 = arith.constant 0 : i32
    return %arg0, %c0_i32 : i32, i32
  }
  func.func @transform_1(%arg0: i32) -> (i32, i32) {
    %c0_i32 = arith.constant 0 : i32
    %c0_i32_0 = arith.constant 0 : i32
    %c0_i32_1 = arith.constant 0 : i32
    return %c0_i32, %c0_i32_0 : i32, i32
  }
  func.func @transform_2(%arg0: i32) -> (i32, i32) {
    %c0_i32 = arith.constant 0 : i32
    %c0_i32_0 = arith.constant 0 : i32
    %c0_i32_1 = arith.constant 0 : i32
    return %c0_i32, %c0_i32_0 : i32, i32
  }
  func.func @transform_3(%arg0: i32) -> (i32, i32) {
    %c0_i32 = arith.constant 0 : i32
    %c0_i32_0 = arith.constant 0 : i32
    %c0_i32_1 = arith.constant 0 : i32
    return %c0_i32, %c0_i32_0 : i32, i32
  }
  func.func @transform_4(%arg0: i32) -> (i32, i32) {
    %c0_i32 = arith.constant 0 : i32
    %c0_i32_0 = arith.constant 0 : i32
    %c0_i32_1 = arith.constant 0 : i32
    return %c0_i32, %c0_i32_0 : i32, i32
  }
  func.func @transform_5(%arg0: i32) -> (i32, i32) {
    %c0_i32 = arith.constant 0 : i32
    %c0_i32_0 = arith.constant 0 : i32
    %c0_i32_1 = arith.constant 0 : i32
    return %c0_i32, %c0_i32_0 : i32, i32
  }
  func.func @transform_6(%arg0: i32) -> (i32, i32) {
    %c0_i32 = arith.constant 0 : i32
    %c0_i32_0 = arith.constant 0 : i32
    %c0_i32_1 = arith.constant 0 : i32
    return %c0_i32, %c0_i32_0 : i32, i32
  }
  func.func @transform_7(%arg0: i32) -> (i32, i32) {
    %c0_i32 = arith.constant 0 : i32
    %c0_i32_0 = arith.constant 0 : i32
    return %arg0, %c0_i32 : i32, i32
  }
}

</mosaic_0001>

<llo_original>
// kernel: tpu_custom_call.1
$region0: #{tpu_custom_call.1}
  #allocation0 [shape = 'u32[]', space=smem, size = 0x4, offset = 0x4, fixed_abs, tag = 'smem constant byte address 0x4 - core index']
  #allocation1 [shape = 'u32[144,128]{1,0:T(1,128)}', space=vmem, size = 0x12000, scoped, tag = 'internal scratch']
  %s0 = inlined_call_operand.hbm [shape: f32[256,128], index: 0, kind: input, shape index: {}]
  %s1 = inlined_call_operand.hbm [shape: bf16[128,256], index: 1, kind: input, shape index: {}]
  %s2 = inlined_call_operand.vmem [shape: bf16[1,256], index: 2, kind: input, shape index: {}]
  %s3 = inlined_call_operand.hbm [shape: bf16[256,128], index: 3, kind: input, shape index: {}]
  %s4 = inlined_call_operand.vmem [shape: f32[1,128], index: 4, kind: input, shape index: {}]
  %s5 = inlined_call_operand.vmem [shape: f32[1,128], index: 5, kind: input, shape index: {}]
  %s6 = inlined_call_operand.vmem [shape: f32[1,128], index: 6, kind: input, shape index: {}]
  %s7 = inlined_call_operand.hbm [shape: f32[256,128], index: 7, kind: output, shape index: {}]
  %s8 = sld [smem:[#allocation0]]
  $region50: #{tpu_custom_call.1} parent=0
    _
  %s10 = ssub.s32 1, %s8
  %s11 = scalar_select 0, %s10, %s8
  $region1: #{tpu_custom_call.1} parent=0
    #allocation2 [shape = 'u8[131072]{0}', space=vmem, size = 0x20000, scoped, tag = 'input window, operand 0, single buffered']
    #allocation3 [shape = 's32[1]{0}', space=sflag, size = 0x4, scoped, tag = 'scoped memory for tpu_custom_call.1']
    #allocation4 [shape = 's32[1]{0}', space=sflag, size = 0x4, scoped, tag = 'scoped memory for tpu_custom_call.1']
    #allocation5 [shape = 'u8[65536]{0}', space=vmem, size = 0x10000, scoped, tag = 'input window, operand 1, single buffered']
    #allocation6 [shape = 's32[1]{0}', space=sflag, size = 0x4, scoped, tag = 'scoped memory for tpu_custom_call.1']
    #allocation7 [shape = 'u8[65536]{0}', space=vmem, size = 0x10000, scoped, tag = 'input window, operand 3, single buffered']
    #allocation8 [shape = 'u8[131072]{0}', space=vmem, size = 0x20000, scoped, tag = 'output window, operand 0, single buffered']
    %12 = vsyncpa [#allocation3], 0
    %13 = vsyncpa [#allocation6], 0
    %14 = vsyncpa [#allocation4], 0
    // Predicated region
    $region2: #{tpu_custom_call.1} parent=1 // pred_check
      _
    $region3: #{tpu_custom_call.1} parent=1 // pred_check_branch
      %16 = sbr.rel (0) target = $region5
    $region4: #{tpu_custom_call.1} parent=1 // pred_region
      %s18 = ssub.s32 4096, 4096
      %19 = vsyncadd [#allocation3], %s18
      %s20 = sshll.u32 [#allocation2], 4
      %s21 = int_to_ptr.vmem [resolvable:$true] %s20
      %26 = dma.hbm_to_vmem [thread:$0]  %s0, 4096, %s21, [#allocation3], 128, 128, 8
    $region5: #{tpu_custom_call.1} parent=1 // pred_fallthru
      _
    // Predicated region
    $region6: #{tpu_custom_call.1} parent=1 // pred_check
      _
    $region7: #{tpu_custom_call.1} parent=1 // pred_check_branch
      %28 = sbr.rel (0) target = $region9
    $region8: #{tpu_custom_call.1} parent=1 // pred_region
      %s30 = ssub.s32 2048, 2048
      %31 = vsyncadd [#allocation6], %s30
      %s32 = sshll.u32 [#allocation5], 4
      %s33 = int_to_ptr.vmem [resolvable:$true] %s32
      %38 = dma.hbm_to_vmem [thread:$0]  %s1, 2048, %s33, [#allocation6], 128, 128, 8
    $region9: #{tpu_custom_call.1} parent=1 // pred_fallthru
      _
    // Predicated region
    $region10: #{tpu_custom_call.1} parent=1 // pred_check
      _
    $region11: #{tpu_custom_call.1} parent=1 // pred_check_branch
      %40 = sbr.rel (0) target = $region13
    $region12: #{tpu_custom_call.1} parent=1 // pred_region
      _
    $region13: #{tpu_custom_call.1} parent=1 // pred_fallthru
      _
    // Predicated region
    $region14: #{tpu_custom_call.1} parent=1 // pred_check
      _
    $region15: #{tpu_custom_call.1} parent=1 // pred_check_branch
      %42 = sbr.rel (0) target = $region17
    $region16: #{tpu_custom_call.1} parent=1 // pred_region
      %s44 = ssub.s32 2048, 2048
      %45 = vsyncadd [#allocation6], %s44
      %s46 = sshll.u32 [#allocation7], 4
      %s47 = int_to_ptr.vmem [resolvable:$true] %s46
      %52 = dma.hbm_to_vmem [thread:$0]  %s3, 2048, %s47, [#allocation6], 64, 64, 4
    $region17: #{tpu_custom_call.1} parent=1 // pred_fallthru
      _
    // Predicated region
    $region18: #{tpu_custom_call.1} parent=1 // pred_check
      _
    $region19: #{tpu_custom_call.1} parent=1 // pred_check_branch
      %54 = sbr.rel (0) target = $region21
    $region20: #{tpu_custom_call.1} parent=1 // pred_region
      _
    $region21: #{tpu_custom_call.1} parent=1 // pred_fallthru
      _
    // Predicated region
    $region22: #{tpu_custom_call.1} parent=1 // pred_check
      _
    $region23: #{tpu_custom_call.1} parent=1 // pred_check_branch
      %56 = sbr.rel (0) target = $region25
    $region24: #{tpu_custom_call.1} parent=1 // pred_region
      _
    $region25: #{tpu_custom_call.1} parent=1 // pred_fallthru
      _
    // Predicated region
    $region26: #{tpu_custom_call.1} parent=1 // pred_check
      _
    $region27: #{tpu_custom_call.1} parent=1 // pred_check_branch
      %58 = sbr.rel (0) target = $region29
    $region28: #{tpu_custom_call.1} parent=1 // pred_region
      _
    $region29: #{tpu_custom_call.1} parent=1 // pred_fallthru
      _
    // Predicated region
    $region30: #{tpu_custom_call.1} parent=1 // pred_check
      _
    $region31: #{tpu_custom_call.1} parent=1 // pred_check_branch
      %60 = sbr.rel (0) target = $region33
    $region32: #{tpu_custom_call.1} parent=1 // pred_region
      %61 = dma.done [#allocation3], 4096
    $region33: #{tpu_custom_call.1} parent=1 // pred_fallthru
      _
    // Predicated region
    $region34: #{tpu_custom_call.1} parent=1 // pred_check
      _
    $region35: #{tpu_custom_call.1} parent=1 // pred_check_branch
      %63 = sbr.rel (0) target = $region37
    $region36: #{tpu_custom_call.1} parent=1 // pred_region
      %64 = dma.done [#allocation6], 2048
    $region37: #{tpu_custom_call.1} parent=1 // pred_fallthru
      _
    // Predicated region
    $region38: #{tpu_custom_call.1} parent=1 // pred_check
      _
    $region39: #{tpu_custom_call.1} parent=1 // pred_check_branch
      %66 = sbr.rel (0) target = $region41
    $region40: #{tpu_custom_call.1} parent=1 // pred_region
      %67 = dma.done [#allocation6], 2048
    $region41: #{tpu_custom_call.1} parent=1 // pred_fallthru
      _
    %v69 = vld [vmem:[#allocation2] sm:$0xff]
    %v70 = vld [vmem:[#allocation2 + $0x8] sm:$0xff]
    %v71 = vld [vmem:[#allocation2 + $0x10] sm:$0xff]
    %v72 = vld [vmem:[#allocation2 + $0x18] sm:$0xff]
    %v73 = vld [vmem:[#allocation2 + $0x20] sm:$0xff]
    %v74 = vld [vmem:[#allocation2 + $0x28] sm:$0xff]
    %v75 = vld [vmem:[#allocation2 + $0x30] sm:$0xff]
    %v76 = vld [vmem:[#allocation2 + $0x38] sm:$0xff]
    %v77 = vld [vmem:[#allocation2 + $0x40] sm:$0xff]
    %v78 = vld [vmem:[#allocation2 + $0x48] sm:$0xff]
    %v79 = vld [vmem:[#allocation2 + $0x50] sm:$0xff]
    %v80 = vld [vmem:[#allocation2 + $0x58] sm:$0xff]
    %v81 = vld [vmem:[#allocation2 + $0x60] sm:$0xff]
    %v82 = vld [vmem:[#allocation2 + $0x68] sm:$0xff]
    %v83 = vld [vmem:[#allocation2 + $0x70] sm:$0xff]
    %v84 = vld [vmem:[#allocation2 + $0x78] sm:$0xff]
    %v85 = vld [vmem:[#allocation2 + $0x80] sm:$0xff]
    %v86 = vld [vmem:[#allocation2 + $0x88] sm:$0xff]
    %v87 = vld [vmem:[#allocation2 + $0x90] sm:$0xff]
    %v88 = vld [vmem:[#allocation2 + $0x98] sm:$0xff]
    %v89 = vld [vmem:[#allocation2 + $0xa0] sm:$0xff]
    %v90 = vld [vmem:[#allocation2 + $0xa8] sm:$0xff]
    %v91 = vld [vmem:[#allocation2 + $0xb0] sm:$0xff]
    %v92 = vld [vmem:[#allocation2 + $0xb8] sm:$0xff]
    %v93 = vld [vmem:[#allocation2 + $0xc0] sm:$0xff]
    %v94 = vld [vmem:[#allocation2 + $0xc8] sm:$0xff]
    %v95 = vld [vmem:[#allocation2 + $0xd0] sm:$0xff]
    %v96 = vld [vmem:[#allocation2 + $0xd8] sm:$0xff]
    %v97 = vld [vmem:[#allocation2 + $0xe0] sm:$0xff]
    %v98 = vld [vmem:[#allocation2 + $0xe8] sm:$0xff]
    %v99 = vld [vmem:[#allocation2 + $0xf0] sm:$0xff]
    %v100 = vld [vmem:[#allocation2 + $0xf8] sm:$0xff]
    %v101 = vld [vmem:[%s5] sm:$0x1]
    %v102 = vld [vmem:[%s6] sm:$0x1]
    %103 = vadd.xlane.f32.xlu0 %v69
    %v104 = vpop.xlane.xlu0 %103
    %105 = vadd.xlane.f32.xlu0 %v70
    %v106 = vpop.xlane.xlu0 %105
    %107 = vadd.xlane.f32.xlu0 %v71
    %v108 = vpop.xlane.xlu0 %107
    %109 = vadd.xlane.f32.xlu0 %v72
    %v110 = vpop.xlane.xlu0 %109
    %111 = vadd.xlane.f32.xlu0 %v73
    %v112 = vpop.xlane.xlu0 %111
    %113 = vadd.xlane.f32.xlu0 %v74
    %v114 = vpop.xlane.xlu0 %113
    %115 = vadd.xlane.f32.xlu0 %v75
    %v116 = vpop.xlane.xlu0 %115
    %117 = vadd.xlane.f32.xlu0 %v76
    %v118 = vpop.xlane.xlu0 %117
    %119 = vadd.xlane.f32.xlu0 %v77
    %v120 = vpop.xlane.xlu0 %119
    %121 = vadd.xlane.f32.xlu0 %v78
    %v122 = vpop.xlane.xlu0 %121
    %123 = vadd.xlane.f32.xlu0 %v79
    %v124 = vpop.xlane.xlu0 %123
    %125 = vadd.xlane.f32.xlu0 %v80
    %v126 = vpop.xlane.xlu0 %125
    %127 = vadd.xlane.f32.xlu0 %v81
    %v128 = vpop.xlane.xlu0 %127
    %129 = vadd.xlane.f32.xlu0 %v82
    %v130 = vpop.xlane.xlu0 %129
    %131 = vadd.xlane.f32.xlu0 %v83
    %v132 = vpop.xlane.xlu0 %131
    %133 = vadd.xlane.f32.xlu0 %v84
    %v134 = vpop.xlane.xlu0 %133
    %135 = vadd.xlane.f32.xlu0 %v85
    %v136 = vpop.xlane.xlu0 %135
    %137 = vadd.xlane.f32.xlu0 %v86
    %v138 = vpop.xlane.xlu0 %137
    %139 = vadd.xlane.f32.xlu0 %v87
    %v140 = vpop.xlane.xlu0 %139
    %141 = vadd.xlane.f32.xlu0 %v88
    %v142 = vpop.xlane.xlu0 %141
    %143 = vadd.xlane.f32.xlu0 %v89
    %v144 = vpop.xlane.xlu0 %143
    %145 = vadd.xlane.f32.xlu0 %v90
    %v146 = vpop.xlane.xlu0 %145
    %147 = vadd.xlane.f32.xlu0 %v91
    %v148 = vpop.xlane.xlu0 %147
    %149 = vadd.xlane.f32.xlu0 %v92
    %v150 = vpop.xlane.xlu0 %149
    %151 = vadd.xlane.f32.xlu0 %v93
    %v152 = vpop.xlane.xlu0 %151
    %153 = vadd.xlane.f32.xlu0 %v94
    %v154 = vpop.xlane.xlu0 %153
    %155 = vadd.xlane.f32.xlu0 %v95
    %v156 = vpop.xlane.xlu0 %155
    %157 = vadd.xlane.f32.xlu0 %v96
    %v158 = vpop.xlane.xlu0 %157
    %159 = vadd.xlane.f32.xlu0 %v97
    %v160 = vpop.xlane.xlu0 %159
    %161 = vadd.xlane.f32.xlu0 %v98
    %v162 = vpop.xlane.xlu0 %161
    %163 = vadd.xlane.f32.xlu0 %v99
    %v164 = vpop.xlane.xlu0 %163
    %165 = vadd.xlane.f32.xlu0 %v100
    %v166 = vpop.xlane.xlu0 %165
    %v167 = vrcp.pop 128.0
    %v168 = vmul.f32 %v104, %v167
    %v169 = vmul.f32 %v106, %v167
    %v170 = vmul.f32 %v108, %v167
    %v171 = vmul.f32 %v110, %v167
    %v172 = vmul.f32 %v112, %v167
    %v173 = vmul.f32 %v114, %v167
    %v174 = vmul.f32 %v116, %v167
    %v175 = vmul.f32 %v118, %v167
    %v176 = vmul.f32 %v120, %v167
    %v177 = vmul.f32 %v122, %v167
    %v178 = vmul.f32 %v124, %v167
    %v179 = vmul.f32 %v126, %v167
    %v180 = vmul.f32 %v128, %v167
    %v181 = vmul.f32 %v130, %v167
    %v182 = vmul.f32 %v132, %v167
    %v183 = vmul.f32 %v134, %v167
    %v184 = vmul.f32 %v136, %v167
    %v185 = vmul.f32 %v138, %v167
    %v186 = vmul.f32 %v140, %v167
    %v187 = vmul.f32 %v142, %v167
    %v188 = vmul.f32 %v144, %v167
    %v189 = vmul.f32 %v146, %v167
    %v190 = vmul.f32 %v148, %v167
    %v191 = vmul.f32 %v150, %v167
    %v192 = vmul.f32 %v152, %v167
    %v193 = vmul.f32 %v154, %v167
    %v194 = vmul.f32 %v156, %v167
    %v195 = vmul.f32 %v158, %v167
    %v196 = vmul.f32 %v160, %v167
    %v197 = vmul.f32 %v162, %v167
    %v198 = vmul.f32 %v164, %v167
    %v199 = vmul.f32 %v166, %v167
    %v200 = vsub.f32 %v69, %v168
    %v201 = vsub.f32 %v70, %v169
    %v202 = vsub.f32 %v71, %v170
    %v203 = vsub.f32 %v72, %v171
    %v204 = vsub.f32 %v73, %v172
    %v205 = vsub.f32 %v74, %v173
    %v206 = vsub.f32 %v75, %v174
    %v207 = vsub.f32 %v76, %v175
    %v208 = vsub.f32 %v77, %v176
    %v209 = vsub.f32 %v78, %v177
    %v210 = vsub.f32 %v79, %v178
    %v211 = vsub.f32 %v80, %v179
    %v212 = vsub.f32 %v81, %v180
    %v213 = vsub.f32 %v82, %v181
    %v214 = vsub.f32 %v83, %v182
    %v215 = vsub.f32 %v84, %v183
    %v216 = vsub.f32 %v85, %v184
    %v217 = vsub.f32 %v86, %v185
    %v218 = vsub.f32 %v87, %v186
    %v219 = vsub.f32 %v88, %v187
    %v220 = vsub.f32 %v89, %v188
    %v221 = vsub.f32 %v90, %v189
    %v222 = vsub.f32 %v91, %v190
    %v223 = vsub.f32 %v92, %v191
    %v224 = vsub.f32 %v93, %v192
    %v225 = vsub.f32 %v94, %v193
    %v226 = vsub.f32 %v95, %v194
    %v227 = vsub.f32 %v96, %v195
    %v228 = vsub.f32 %v97, %v196
    %v229 = vsub.f32 %v98, %v197
    %v230 = vsub.f32 %v99, %v198
    %v231 = vsub.f32 %v100, %v199
    %v232 = vmul.f32 %v200, %v200
    %v233 = vmul.f32 %v201, %v201
    %v234 = vmul.f32 %v202, %v202
    %v235 = vmul.f32 %v203, %v203
    %v236 = vmul.f32 %v204, %v204
    %v237 = vmul.f32 %v205, %v205
    %v238 = vmul.f32 %v206, %v206
    %v239 = vmul.f32 %v207, %v207
    %v240 = vmul.f32 %v208, %v208
    %v241 = vmul.f32 %v209, %v209
    %v242 = vmul.f32 %v210, %v210
    %v243 = vmul.f32 %v211, %v211
    %v244 = vmul.f32 %v212, %v212
    %v245 = vmul.f32 %v213, %v213
    %v246 = vmul.f32 %v214, %v214
    %v247 = vmul.f32 %v215, %v215
    %v248 = vmul.f32 %v216, %v216
    %v249 = vmul.f32 %v217, %v217
    %v250 = vmul.f32 %v218, %v218
    %v251 = vmul.f32 %v219, %v219
    %v252 = vmul.f32 %v220, %v220
    %v253 = vmul.f32 %v221, %v221
    %v254 = vmul.f32 %v222, %v222
    %v255 = vmul.f32 %v223, %v223
    %v256 = vmul.f32 %v224, %v224
    %v257 = vmul.f32 %v225, %v225
    %v258 = vmul.f32 %v226, %v226
    %v259 = vmul.f32 %v227, %v227
    %v260 = vmul.f32 %v228, %v228
    %v261 = vmul.f32 %v229, %v229
    %v262 = vmul.f32 %v230, %v230
    %v263 = vmul.f32 %v231, %v231
    %264 = vadd.xlane.f32.xlu0 %v232
    %v265 = vpop.xlane.xlu0 %264
    %266 = vadd.xlane.f32.xlu0 %v233
    %v267 = vpop.xlane.xlu0 %266
    %268 = vadd.xlane.f32.xlu0 %v234
    %v269 = vpop.xlane.xlu0 %268
    %270 = vadd.xlane.f32.xlu0 %v235
    %v271 = vpop.xlane.xlu0 %270
    %272 = vadd.xlane.f32.xlu0 %v236
    %v273 = vpop.xlane.xlu0 %272
    %274 = vadd.xlane.f32.xlu0 %v237
    %v275 = vpop.xlane.xlu0 %274
    %276 = vadd.xlane.f32.xlu0 %v238
    %v277 = vpop.xlane.xlu0 %276
    %278 = vadd.xlane.f32.xlu0 %v239
    %v279 = vpop.xlane.xlu0 %278
    %280 = vadd.xlane.f32.xlu0 %v240
    %v281 = vpop.xlane.xlu0 %280
    %282 = vadd.xlane.f32.xlu0 %v241
    %v283 = vpop.xlane.xlu0 %282
    %284 = vadd.xlane.f32.xlu0 %v242
    %v285 = vpop.xlane.xlu0 %284
    %286 = vadd.xlane.f32.xlu0 %v243
    %v287 = vpop.xlane.xlu0 %286
    %288 = vadd.xlane.f32.xlu0 %v244
    %v289 = vpop.xlane.xlu0 %288
    %290 = vadd.xlane.f32.xlu0 %v245
    %v291 = vpop.xlane.xlu0 %290
    %292 = vadd.xlane.f32.xlu0 %v246
    %v293 = vpop.xlane.xlu0 %292
    %294 = vadd.xlane.f32.xlu0 %v247
    %v295 = vpop.xlane.xlu0 %294
    %296 = vadd.xlane.f32.xlu0 %v248
    %v297 = vpop.xlane.xlu0 %296
    %298 = vadd.xlane.f32.xlu0 %v249
    %v299 = vpop.xlane.xlu0 %298
    %300 = vadd.xlane.f32.xlu0 %v250
    %v301 = vpop.xlane.xlu0 %300
    %302 = vadd.xlane.f32.xlu0 %v251
    %v303 = vpop.xlane.xlu0 %302
    %304 = vadd.xlane.f32.xlu0 %v252
    %v305 = vpop.xlane.xlu0 %304
    %306 = vadd.xlane.f32.xlu0 %v253
    %v307 = vpop.xlane.xlu0 %306
    %308 = vadd.xlane.f32.xlu0 %v254
    %v309 = vpop.xlane.xlu0 %308
    %310 = vadd.xlane.f32.xlu0 %v255
    %v311 = vpop.xlane.xlu0 %310
    %312 = vadd.xlane.f32.xlu0 %v256
    %v313 = vpop.xlane.xlu0 %312
    %314 = vadd.xlane.f32.xlu0 %v257
    %v315 = vpop.xlane.xlu0 %314
    %316 = vadd.xlane.f32.xlu0 %v258
    %v317 = vpop.xlane.xlu0 %316
    %318 = vadd.xlane.f32.xlu0 %v259
    %v319 = vpop.xlane.xlu0 %318
    %320 = vadd.xlane.f32.xlu0 %v260
    %v321 = vpop.xlane.xlu0 %320
    %322 = vadd.xlane.f32.xlu0 %v261
    %v323 = vpop.xlane.xlu0 %322
    %324 = vadd.xlane.f32.xlu0 %v262
    %v325 = vpop.xlane.xlu0 %324
    %326 = vadd.xlane.f32.xlu0 %v263
    %v327 = vpop.xlane.xlu0 %326
    %v328 = vmul.f32 %v265, %v167
    %v329 = vmul.f32 %v267, %v167
    %v330 = vmul.f32 %v269, %v167
    %v331 = vmul.f32 %v271, %v167
    %v332 = vmul.f32 %v273, %v167
    %v333 = vmul.f32 %v275, %v167
    %v334 = vmul.f32 %v277, %v167
    %v335 = vmul.f32 %v279, %v167
    %v336 = vmul.f32 %v281, %v167
    %v337 = vmul.f32 %v283, %v167
    %v338 = vmul.f32 %v285, %v167
    %v339 = vmul.f32 %v287, %v167
    %v340 = vmul.f32 %v289, %v167
    %v341 = vmul.f32 %v291, %v167
    %v342 = vmul.f32 %v293, %v167
    %v343 = vmul.f32 %v295, %v167
    %v344 = vmul.f32 %v297, %v167
    %v345 = vmul.f32 %v299, %v167
    %v346 = vmul.f32 %v301, %v167
    %v347 = vmul.f32 %v303, %v167
    %v348 = vmul.f32 %v305, %v167
    %v349 = vmul.f32 %v307, %v167
    %v350 = vmul.f32 %v309, %v167
    %v351 = vmul.f32 %v311, %v167
    %v352 = vmul.f32 %v313, %v167
    %v353 = vmul.f32 %v315, %v167
    %v354 = vmul.f32 %v317, %v167
    %v355 = vmul.f32 %v319, %v167
    %v356 = vmul.f32 %v321, %v167
    %v357 = vmul.f32 %v323, %v167
    %v358 = vmul.f32 %v325, %v167
    %v359 = vmul.f32 %v327, %v167
    %v360 = vadd.f32 %v328, 1e-05
    %v361 = vadd.f32 %v329, 1e-05
    %v362 = vadd.f32 %v330, 1e-05
    %v363 = vadd.f32 %v331, 1e-05
    %v364 = vadd.f32 %v332, 1e-05
    %v365 = vadd.f32 %v333, 1e-05
    %v366 = vadd.f32 %v334, 1e-05
    %v367 = vadd.f32 %v335, 1e-05
    %v368 = vadd.f32 %v336, 1e-05
    %v369 = vadd.f32 %v337, 1e-05
    %v370 = vadd.f32 %v338, 1e-05
    %v371 = vadd.f32 %v339, 1e-05
    %v372 = vadd.f32 %v340, 1e-05
    %v373 = vadd.f32 %v341, 1e-05
    %v374 = vadd.f32 %v342, 1e-05
    %v375 = vadd.f32 %v343, 1e-05
    %v376 = vadd.f32 %v344, 1e-05
    %v377 = vadd.f32 %v345, 1e-05
    %v378 = vadd.f32 %v346, 1e-05
    %v379 = vadd.f32 %v347, 1e-05
    %v380 = vadd.f32 %v348, 1e-05
    %v381 = vadd.f32 %v349, 1e-05
    %v382 = vadd.f32 %v350, 1e-05
    %v383 = vadd.f32 %v351, 1e-05
    %v384 = vadd.f32 %v352, 1e-05
    %v385 = vadd.f32 %v353, 1e-05
    %v386 = vadd.f32 %v354, 1e-05
    %v387 = vadd.f32 %v355, 1e-05
    %v388 = vadd.f32 %v356, 1e-05
    %v389 = vadd.f32 %v357, 1e-05
    %v390 = vadd.f32 %v358, 1e-05
    %v391 = vadd.f32 %v359, 1e-05
    %v392 = vrsqrt.pop %v360
    %v393 = vrsqrt.pop %v361
    %v394 = vrsqrt.pop %v362
    %v395 = vrsqrt.pop %v363
    %v396 = vrsqrt.pop %v364
    %v397 = vrsqrt.pop %v365
    %v398 = vrsqrt.pop %v366
    %v399 = vrsqrt.pop %v367
    %v400 = vrsqrt.pop %v368
    %v401 = vrsqrt.pop %v369
    %v402 = vrsqrt.pop %v370
    %v403 = vrsqrt.pop %v371
    %v404 = vrsqrt.pop %v372
    %v405 = vrsqrt.pop %v373
    %v406 = vrsqrt.pop %v374
    %v407 = vrsqrt.pop %v375
    %v408 = vrsqrt.pop %v376
    %v409 = vrsqrt.pop %v377
    %v410 = vrsqrt.pop %v378
    %v411 = vrsqrt.pop %v379
    %v412 = vrsqrt.pop %v380
    %v413 = vrsqrt.pop %v381
    %v414 = vrsqrt.pop %v382
    %v415 = vrsqrt.pop %v383
    %v416 = vrsqrt.pop %v384
    %v417 = vrsqrt.pop %v385
    %v418 = vrsqrt.pop %v386
    %v419 = vrsqrt.pop %v387
    %v420 = vrsqrt.pop %v388
    %v421 = vrsqrt.pop %v389
    %v422 = vrsqrt.pop %v390
    %v423 = vrsqrt.pop %v391
    %v424 = vmul.f32 %v200, %v392
    %v425 = vmul.f32 %v201, %v393
    %v426 = vmul.f32 %v202, %v394
    %v427 = vmul.f32 %v203, %v395
    %v428 = vmul.f32 %v204, %v396
    %v429 = vmul.f32 %v205, %v397
    %v430 = vmul.f32 %v206, %v398
    %v431 = vmul.f32 %v207, %v399
    %v432 = vmul.f32 %v208, %v400
    %v433 = vmul.f32 %v209, %v401
    %v434 = vmul.f32 %v210, %v402
    %v435 = vmul.f32 %v211, %v403
    %v436 = vmul.f32 %v212, %v404
    %v437 = vmul.f32 %v213, %v405
    %v438 = vmul.f32 %v214, %v406
    %v439 = vmul.f32 %v215, %v407
    %v440 = vmul.f32 %v216, %v408
    %v441 = vmul.f32 %v217, %v409
    %v442 = vmul.f32 %v218, %v410
    %v443 = vmul.f32 %v219, %v411
    %v444 = vmul.f32 %v220, %v412
    %v445 = vmul.f32 %v221, %v413
    %v446 = vmul.f32 %v222, %v414
    %v447 = vmul.f32 %v223, %v415
    %v448 = vmul.f32 %v224, %v416
    %v449 = vmul.f32 %v225, %v417
    %v450 = vmul.f32 %v226, %v418
    %v451 = vmul.f32 %v227, %v419
    %v452 = vmul.f32 %v228, %v420
    %v453 = vmul.f32 %v229, %v421
    %v454 = vmul.f32 %v230, %v422
    %v455 = vmul.f32 %v231, %v423
    %v457 = vlaneseq
    %v458 = vshrl.u32 %v457, 7
    %v459 = vsub.s32 0, %v458
    %v460 = vrot.slane %v101, %v459
    %v462 = vmul.f32 %v424, %v460
    %v463 = vmul.f32 %v425, %v460
    %v464 = vmul.f32 %v426, %v460
    %v465 = vmul.f32 %v427, %v460
    %v466 = vmul.f32 %v428, %v460
    %v467 = vmul.f32 %v429, %v460
    %v468 = vmul.f32 %v430, %v460
    %v469 = vmul.f32 %v431, %v460
    %v470 = vmul.f32 %v432, %v460
    %v471 = vmul.f32 %v433, %v460
    %v472 = vmul.f32 %v434, %v460
    %v473 = vmul.f32 %v435, %v460
    %v474 = vmul.f32 %v436, %v460
    %v475 = vmul.f32 %v437, %v460
    %v476 = vmul.f32 %v438, %v460
    %v477 = vmul.f32 %v439, %v460
    %v478 = vmul.f32 %v440, %v460
    %v479 = vmul.f32 %v441, %v460
    %v480 = vmul.f32 %v442, %v460
    %v481 = vmul.f32 %v443, %v460
    %v482 = vmul.f32 %v444, %v460
    %v483 = vmul.f32 %v445, %v460
    %v484 = vmul.f32 %v446, %v460
    %v485 = vmul.f32 %v447, %v460
    %v486 = vmul.f32 %v448, %v460
    %v487 = vmul.f32 %v449, %v460
    %v488 = vmul.f32 %v450, %v460
    %v489 = vmul.f32 %v451, %v460
    %v490 = vmul.f32 %v452, %v460
    %v491 = vmul.f32 %v453, %v460
    %v492 = vmul.f32 %v454, %v460
    %v493 = vmul.f32 %v455, %v460
    %v495 = vlaneseq
    %v496 = vshrl.u32 %v495, 7
    %v497 = vsub.s32 0, %v496
    %v498 = vrot.slane %v102, %v497
    %v500 = vadd.f32 %v462, %v498
    %v501 = vadd.f32 %v463, %v498
    %v502 = vadd.f32 %v464, %v498
    %v503 = vadd.f32 %v465, %v498
    %v504 = vadd.f32 %v466, %v498
    %v505 = vadd.f32 %v467, %v498
    %v506 = vadd.f32 %v468, %v498
    %v507 = vadd.f32 %v469, %v498
    %v508 = vadd.f32 %v470, %v498
    %v509 = vadd.f32 %v471, %v498
    %v510 = vadd.f32 %v472, %v498
    %v511 = vadd.f32 %v473, %v498
    %v512 = vadd.f32 %v474, %v498
    %v513 = vadd.f32 %v475, %v498
    %v514 = vadd.f32 %v476, %v498
    %v515 = vadd.f32 %v477, %v498
    %v516 = vadd.f32 %v478, %v498
    %v517 = vadd.f32 %v479, %v498
    %v518 = vadd.f32 %v480, %v498
    %v519 = vadd.f32 %v481, %v498
    %v520 = vadd.f32 %v482, %v498
    %v521 = vadd.f32 %v483, %v498
    %v522 = vadd.f32 %v484, %v498
    %v523 = vadd.f32 %v485, %v498
    %v524 = vadd.f32 %v486, %v498
    %v525 = vadd.f32 %v487, %v498
    %v526 = vadd.f32 %v488, %v498
    %v527 = vadd.f32 %v489, %v498
    %v528 = vadd.f32 %v490, %v498
    %v529 = vadd.f32 %v491, %v498
    %v530 = vadd.f32 %v492, %v498
    %v531 = vadd.f32 %v493, %v498
    %v532 = vpack.c.bf16 %v501, %v500
    %v533 = vpack.c.bf16 %v503, %v502
    %v534 = vpack.c.bf16 %v505, %v504
    %v535 = vpack.c.bf16 %v507, %v506
    %v536 = vpack.c.bf16 %v509, %v508
    %v537 = vpack.c.bf16 %v511, %v510
    %v538 = vpack.c.bf16 %v513, %v512
    %v539 = vpack.c.bf16 %v515, %v514
    %v540 = vpack.c.bf16 %v517, %v516
    %v541 = vpack.c.bf16 %v519, %v518
    %v542 = vpack.c.bf16 %v521, %v520
    %v543 = vpack.c.bf16 %v523, %v522
    %v544 = vpack.c.bf16 %v525, %v524
    %v545 = vpack.c.bf16 %v527, %v526
    %v546 = vpack.c.bf16 %v529, %v528
    %v547 = vpack.c.bf16 %v531, %v530
    %v548 = vld [vmem:[#allocation5] sm:$0xff]
    %v549 = vld [vmem:[#allocation5 + $0x8] sm:$0xff]
    %v550 = vld [vmem:[#allocation5 + $0x10] sm:$0xff]
    %v551 = vld [vmem:[#allocation5 + $0x18] sm:$0xff]
    %v552 = vld [vmem:[#allocation5 + $0x20] sm:$0xff]
    %v553 = vld [vmem:[#allocation5 + $0x28] sm:$0xff]
    %v554 = vld [vmem:[#allocation5 + $0x30] sm:$0xff]
    %v555 = vld [vmem:[#allocation5 + $0x38] sm:$0xff]
    %v556 = vld [vmem:[#allocation5 + $0x40] sm:$0xff]
    %v557 = vld [vmem:[#allocation5 + $0x48] sm:$0xff]
    %v558 = vld [vmem:[#allocation5 + $0x50] sm:$0xff]
    %v559 = vld [vmem:[#allocation5 + $0x58] sm:$0xff]
    %v560 = vld [vmem:[#allocation5 + $0x60] sm:$0xff]
    %v561 = vld [vmem:[#allocation5 + $0x68] sm:$0xff]
    %v562 = vld [vmem:[#allocation5 + $0x70] sm:$0xff]
    %v563 = vld [vmem:[#allocation5 + $0x78] sm:$0xff]
    %v580 = vunpack.c.l.b16 %v548
    %v581 = vunpack.c.h.b16 %v548
    %v582 = vunpack.c.l.b16 %v549
    %v583 = vunpack.c.h.b16 %v549
    %v584 = vunpack.c.l.b16 %v550
    %v585 = vunpack.c.h.b16 %v550
    %v586 = vunpack.c.l.b16 %v551
    %v587 = vunpack.c.h.b16 %v551
    %v588 = vunpack.c.l.b16 %v552
    %v589 = vunpack.c.h.b16 %v552
    %v590 = vunpack.c.l.b16 %v553
    %v591 = vunpack.c.h.b16 %v553
    %v592 = vunpack.c.l.b16 %v554
    %v593 = vunpack.c.h.b16 %v554
    %v594 = vunpack.c.l.b16 %v555
    %v595 = vunpack.c.h.b16 %v555
    %v596 = vunpack.c.l.b16 %v556
    %v597 = vunpack.c.h.b16 %v556
    %v598 = vunpack.c.l.b16 %v557
    %v599 = vunpack.c.h.b16 %v557
    %v600 = vunpack.c.l.b16 %v558
    %v601 = vunpack.c.h.b16 %v558
    %v602 = vunpack.c.l.b16 %v559
    %v603 = vunpack.c.h.b16 %v559
    %v604 = vunpack.c.l.b16 %v560
    %v605 = vunpack.c.h.b16 %v560
    %v606 = vunpack.c.l.b16 %v561
    %v607 = vunpack.c.h.b16 %v561
    %v608 = vunpack.c.l.b16 %v562
    %v609 = vunpack.c.h.b16 %v562
    %v610 = vunpack.c.l.b16 %v563
    %v611 = vunpack.c.h.b16 %v563
    %v612 = vpack.c.b16 %v582, %v580
    %v613 = vpack.c.b16 %v583, %v581
    %v614 = vpack.c.b16 %v586, %v584
    %v615 = vpack.c.b16 %v587, %v585
    %v616 = vpack.c.b16 %v590, %v588
    %v617 = vpack.c.b16 %v591, %v589
    %v618 = vpack.c.b16 %v594, %v592
    %v619 = vpack.c.b16 %v595, %v593
    %v620 = vpack.c.b16 %v598, %v596
    %v621 = vpack.c.b16 %v599, %v597
    %v622 = vpack.c.b16 %v602, %v600
    %v623 = vpack.c.b16 %v603, %v601
    %v624 = vpack.c.b16 %v606, %v604
    %v625 = vpack.c.b16 %v607, %v605
    %v626 = vpack.c.b16 %v610, %v608
    %v627 = vpack.c.b16 %v611, %v609
    %644 = vmatprep.subr.bf16.mxu0 %v627
    %645 = vmatpush1.bf16.msra.mxu0 %v626
    %646 = vmatprep.subr.bf16.mxu0 %v625
    %647 = vmatpush1.bf16.msra.mxu0 %v624
    %648 = vmatprep.subr.bf16.mxu0 %v623
    %649 = vmatpush1.bf16.msra.mxu0 %v622
    %650 = vmatprep.subr.bf16.mxu0 %v621
    %651 = vmatpush1.bf16.msra.mxu0 %v620
    %652 = vmatprep.subr.bf16.mxu0 %v619
    %653 = vmatpush1.bf16.msra.mxu0 %v618
    %654 = vmatprep.subr.bf16.mxu0 %v617
    %655 = vmatpush1.bf16.msra.mxu0 %v616
    %656 = vmatprep.subr.bf16.mxu0 %v615
    %657 = vmatpush1.bf16.msra.mxu0 %v614
    %658 = vmatprep.subr.bf16.mxu0 %v613
    %659 = vmatpush1.bf16.msra.mxu0 %v612
    %660 = vmatprep.subr.bf16.mxu0 0
    %661 = vmatpush2.bf16.msra.mxu0 0
    %662 = vmatprep.subr.bf16.mxu0 0
    %663 = vmatpush2.bf16.msra.mxu0 0
    %664 = vmatprep.subr.bf16.mxu0 0
    %665 = vmatpush2.bf16.msra.mxu0 0
    %666 = vmatprep.subr.bf16.mxu0 0
    %667 = vmatpush2.bf16.msra.mxu0 0
    %668 = vmatprep.subr.bf16.mxu0 0
    %669 = vmatpush2.bf16.msra.mxu0 0
    %670 = vmatprep.subr.bf16.mxu0 0
    %671 = vmatpush2.bf16.msra.mxu0 0
    %672 = vmatprep.subr.bf16.mxu0 0
    %673 = vmatpush2.bf16.msra.mxu0 0
    %674 = vmatprep.subr.bf16.mxu0 0
    %675 = vmatpush2.bf16.msra.mxu0 0
    %676 = vmatprep.mubr.bf16.mxu0 0
    %677 = vmatmul.mubr.bf16.gmra.mxu0 %v532
    %v678 = vpop.f32.mrf.mxu0
    %v679 = vadd.f32 0.0, %v678
    %v680 = vpop.f32.mrf.mxu0
    %v681 = vadd.f32 0.0, %v680
    %v682 = vpop.f32.mrf.mxu0
    %v683 = vadd.f32 0.0, %v682
    %v684 = vpop.f32.mrf.mxu0
    %v685 = vadd.f32 0.0, %v684
    %686 = vmatprep.mubr.bf16.mxu0 0
    %687 = vmatmul.mubr.bf16.gmra.mxu0 %v533
    %v688 = vpop.f32.mrf.mxu0
    %v689 = vadd.f32 0.0, %v688
    %v690 = vpop.f32.mrf.mxu0
    %v691 = vadd.f32 0.0, %v690
    %v692 = vpop.f32.mrf.mxu0
    %v693 = vadd.f32 0.0, %v692
    %v694 = vpop.f32.mrf.mxu0
    %v695 = vadd.f32 0.0, %v694
    %696 = vmatprep.mubr.bf16.mxu0 0
    %697 = vmatmul.mubr.bf16.gmra.mxu0 %v534
    %v698 = vpop.f32.mrf.mxu0
    %v699 = vadd.f32 0.0, %v698
    %v700 = vpop.f32.mrf.mxu0
    %v701 = vadd.f32 0.0, %v700
    %v702 = vpop.f32.mrf.mxu0
    %v703 = vadd.f32 0.0, %v702
    %v704 = vpop.f32.mrf.mxu0
    %v705 = vadd.f32 0.0, %v704
    %706 = vmatprep.mubr.bf16.mxu0 0
    %707 = vmatmul.mubr.bf16.gmra.mxu0 %v535
    %v708 = vpop.f32.mrf.mxu0
    %v709 = vadd.f32 0.0, %v708
    %v710 = vpop.f32.mrf.mxu0
    %v711 = vadd.f32 0.0, %v710
    %v712 = vpop.f32.mrf.mxu0
    %v713 = vadd.f32 0.0, %v712
    %v714 = vpop.f32.mrf.mxu0
    %v715 = vadd.f32 0.0, %v714
    %716 = vmatprep.mubr.bf16.mxu0 0
    %717 = vmatmul.mubr.bf16.gmra.mxu0 %v536
    %v718 = vpop.f32.mrf.mxu0
    %v719 = vadd.f32 0.0, %v718
    %v720 = vpop.f32.mrf.mxu0
    %v721 = vadd.f32 0.0, %v720
    %v722 = vpop.f32.mrf.mxu0
    %v723 = vadd.f32 0.0, %v722
    %v724 = vpop.f32.mrf.mxu0
    %v725 = vadd.f32 0.0, %v724
    %726 = vmatprep.mubr.bf16.mxu0 0
    %727 = vmatmul.mubr.bf16.gmra.mxu0 %v537
    %v728 = vpop.f32.mrf.mxu0
    %v729 = vadd.f32 0.0, %v728
    %v730 = vpop.f32.mrf.mxu0
    %v731 = vadd.f32 0.0, %v730
    %v732 = vpop.f32.mrf.mxu0
    %v733 = vadd.f32 0.0, %v732
    %v734 = vpop.f32.mrf.mxu0
    %v735 = vadd.f32 0.0, %v734
    %736 = vmatprep.mubr.bf16.mxu0 0
    %737 = vmatmul.mubr.bf16.gmra.mxu0 %v538
    %v738 = vpop.f32.mrf.mxu0
    %v739 = vadd.f32 0.0, %v738
    %v740 = vpop.f32.mrf.mxu0
    %v741 = vadd.f32 0.0, %v740
    %v742 = vpop.f32.mrf.mxu0
    %v743 = vadd.f32 0.0, %v742
    %v744 = vpop.f32.mrf.mxu0
    %v745 = vadd.f32 0.0, %v744
    %746 = vmatprep.mubr.bf16.mxu0 0
    %747 = vmatmul.mubr.bf16.gmra.mxu0 %v539
    %v748 = vpop.f32.mrf.mxu0
    %v749 = vadd.f32 0.0, %v748
    %v750 = vpop.f32.mrf.mxu0
    %v751 = vadd.f32 0.0, %v750
    %v752 = vpop.f32.mrf.mxu0
    %v753 = vadd.f32 0.0, %v752
    %v754 = vpop.f32.mrf.mxu0
    %v755 = vadd.f32 0.0, %v754
    %756 = vmatprep.mubr.bf16.mxu0 0
    %757 = vmatmul.mubr.bf16.gmra.mxu0 %v540
    %v758 = vpop.f32.mrf.mxu0
    %v759 = vadd.f32 0.0, %v758
    %v760 = vpop.f32.mrf.mxu0
    %v761 = vadd.f32 0.0, %v760
    %v762 = vpop.f32.mrf.mxu0
    %v763 = vadd.f32 0.0, %v762
    %v764 = vpop.f32.mrf.mxu0
    %v765 = vadd.f32 0.0, %v764
    %766 = vmatprep.mubr.bf16.mxu0 0
    %767 = vmatmul.mubr.bf16.gmra.mxu0 %v541
    %v768 = vpop.f32.mrf.mxu0
    %v769 = vadd.f32 0.0, %v768
    %v770 = vpop.f32.mrf.mxu0
    %v771 = vadd.f32 0.0, %v770
    %v772 = vpop.f32.mrf.mxu0
    %v773 = vadd.f32 0.0, %v772
    %v774 = vpop.f32.mrf.mxu0
    %v775 = vadd.f32 0.0, %v774
    %776 = vmatprep.mubr.bf16.mxu0 0
    %777 = vmatmul.mubr.bf16.gmra.mxu0 %v542
    %v778 = vpop.f32.mrf.mxu0
    %v779 = vadd.f32 0.0, %v778
    %v780 = vpop.f32.mrf.mxu0
    %v781 = vadd.f32 0.0, %v780
    %v782 = vpop.f32.mrf.mxu0
    %v783 = vadd.f32 0.0, %v782
    %v784 = vpop.f32.mrf.mxu0
    %v785 = vadd.f32 0.0, %v784
    %786 = vmatprep.mubr.bf16.mxu0 0
    %787 = vmatmul.mubr.bf16.gmra.mxu0 %v543
    %v788 = vpop.f32.mrf.mxu0
    %v789 = vadd.f32 0.0, %v788
    %v790 = vpop.f32.mrf.mxu0
    %v791 = vadd.f32 0.0, %v790
    %v792 = vpop.f32.mrf.mxu0
    %v793 = vadd.f32 0.0, %v792
    %v794 = vpop.f32.mrf.mxu0
    %v795 = vadd.f32 0.0, %v794
    %796 = vmatprep.mubr.bf16.mxu0 0
    %797 = vmatmul.mubr.bf16.gmra.mxu0 %v544
    %v798 = vpop.f32.mrf.mxu0
    %v799 = vadd.f32 0.0, %v798
    %v800 = vpop.f32.mrf.mxu0
    %v801 = vadd.f32 0.0, %v800
    %v802 = vpop.f32.mrf.mxu0
    %v803 = vadd.f32 0.0, %v802
    %v804 = vpop.f32.mrf.mxu0
    %v805 = vadd.f32 0.0, %v804
    %806 = vmatprep.mubr.bf16.mxu0 0
    %807 = vmatmul.mubr.bf16.gmra.mxu0 %v545
    %v808 = vpop.f32.mrf.mxu0
    %v809 = vadd.f32 0.0, %v808
    %v810 = vpop.f32.mrf.mxu0
    %v811 = vadd.f32 0.0, %v810
    %v812 = vpop.f32.mrf.mxu0
    %v813 = vadd.f32 0.0, %v812
    %v814 = vpop.f32.mrf.mxu0
    %v815 = vadd.f32 0.0, %v814
    %816 = vmatprep.mubr.bf16.mxu0 0
    %817 = vmatmul.mubr.bf16.gmra.mxu0 %v546
    %v818 = vpop.f32.mrf.mxu0
    %v819 = vadd.f32 0.0, %v818
    %v820 = vpop.f32.mrf.mxu0
    %v821 = vadd.f32 0.0, %v820
    %v822 = vpop.f32.mrf.mxu0
    %v823 = vadd.f32 0.0, %v822
    %v824 = vpop.f32.mrf.mxu0
    %v825 = vadd.f32 0.0, %v824
    %826 = vmatprep.mubr.bf16.mxu0 0
    %827 = vmatmul.mubr.bf16.gmra.mxu0 %v547
    %v828 = vpop.f32.mrf.mxu0
    %v829 = vadd.f32 0.0, %v828
    %v830 = vpop.f32.mrf.mxu0
    %v831 = vadd.f32 0.0, %v830
    %v832 = vpop.f32.mrf.mxu0
    %v833 = vadd.f32 0.0, %v832
    %v834 = vpop.f32.mrf.mxu0
    %v835 = vadd.f32 0.0, %v834
    %836 = vdwg.mxu0
    %v837 = vpack.c.bf16 %v683, %v679
    %v838 = vpack.c.bf16 %v685, %v681
    %v839 = vpack.c.bf16 %v693, %v689
    %v840 = vpack.c.bf16 %v695, %v691
    %v841 = vpack.c.bf16 %v703, %v699
    %v842 = vpack.c.bf16 %v705, %v701
    %v843 = vpack.c.bf16 %v713, %v709
    %v844 = vpack.c.bf16 %v715, %v711
    %v845 = vpack.c.bf16 %v723, %v719
    %v846 = vpack.c.bf16 %v725, %v721
    %v847 = vpack.c.bf16 %v733, %v729
    %v848 = vpack.c.bf16 %v735, %v731
    %v849 = vpack.c.bf16 %v743, %v739
    %v850 = vpack.c.bf16 %v745, %v741
    %v851 = vpack.c.bf16 %v753, %v749
    %v852 = vpack.c.bf16 %v755, %v751
    %v853 = vpack.c.bf16 %v763, %v759
    %v854 = vpack.c.bf16 %v765, %v761
    %v855 = vpack.c.bf16 %v773, %v769
    %v856 = vpack.c.bf16 %v775, %v771
    %v857 = vpack.c.bf16 %v783, %v779
    %v858 = vpack.c.bf16 %v785, %v781
    %v859 = vpack.c.bf16 %v793, %v789
    %v860 = vpack.c.bf16 %v795, %v791
    %v861 = vpack.c.bf16 %v803, %v799
    %v862 = vpack.c.bf16 %v805, %v801
    %v863 = vpack.c.bf16 %v813, %v809
    %v864 = vpack.c.bf16 %v815, %v811
    %v865 = vpack.c.bf16 %v823, %v819
    %v866 = vpack.c.bf16 %v825, %v821
    %v867 = vpack.c.bf16 %v833, %v829
    %v868 = vpack.c.bf16 %v835, %v831
    %v869 = vld [vmem:[%s2] sm:$0x3]
    %v872 = vunpack.c.l.s4 1966171168
    %v873 = vunpack.c.0.s8 %v872
    %v874 = vlaneseq
    %v875 = vshrl.u32 %v874, 7
    %v876 = vsub.s32 %v873, %v875
    %v877 = vrot.slane %v869, %v876
    %v878 = vcombine.high %v877, %v877
    %v880 = vunpack.c.l.s4 1966171168
    %v881 = vunpack.c.0.s8 %v880
    %v882 = vlaneseq
    %v883 = vshrl.u32 %v882, 7
    %v884 = vsub.s32 %v881, %v883
    %v885 = vrot.slane %v877, %v884
    %v887 = vunpack.c.l.s4 1966171168
    %v888 = vunpack.c.0.s8 %v887
    %v889 = vlaneseq
    %v890 = vshrl.u32 %v889, 7
    %v891 = vsub.s32 %v888, %v890
    %v892 = vrot.slane %v878, %v891
    %v894 = vpack.i.b16 %v885, %v885
    %v896 = vlaneseq
    %v897 = vshrl.u32 %v896, 7
    %v898 = vsub.s32 0, %v897
    %v899 = vrot.slane %v894, %v898
    %v901 = vpack.i.b16 %v892, %v892
    %v903 = vlaneseq
    %v904 = vshrl.u32 %v903, 7
    %v905 = vsub.s32 0, %v904
    %v906 = vrot.slane %v901, %v905
    %v907 = vadd.bf16 %v837, %v899
    %v908 = vadd.bf16 %v838, %v906
    %v909 = vadd.bf16 %v839, %v899
    %v910 = vadd.bf16 %v840, %v906
    %v911 = vadd.bf16 %v841, %v899
    %v912 = vadd.bf16 %v842, %v906
    %v913 = vadd.bf16 %v843, %v899
    %v914 = vadd.bf16 %v844, %v906
    %v915 = vadd.bf16 %v845, %v899
    %v916 = vadd.bf16 %v846, %v906
    %v917 = vadd.bf16 %v847, %v899
    %v918 = vadd.bf16 %v848, %v906
    %v919 = vadd.bf16 %v849, %v899
    %v920 = vadd.bf16 %v850, %v906
    %v921 = vadd.bf16 %v851, %v899
    %v922 = vadd.bf16 %v852, %v906
    %v923 = vadd.bf16 %v853, %v899
    %v924 = vadd.bf16 %v854, %v906
    %v925 = vadd.bf16 %v855, %v899
    %v926 = vadd.bf16 %v856, %v906
    %v927 = vadd.bf16 %v857, %v899
    %v928 = vadd.bf16 %v858, %v906
    %v929 = vadd.bf16 %v859, %v899
    %v930 = vadd.bf16 %v860, %v906
    %v931 = vadd.bf16 %v861, %v899
    %v932 = vadd.bf16 %v862, %v906
    %v933 = vadd.bf16 %v863, %v899
    %v934 = vadd.bf16 %v864, %v906
    %v935 = vadd.bf16 %v865, %v899
    %v936 = vadd.bf16 %v866, %v906
    %v937 = vadd.bf16 %v867, %v899
    %v938 = vadd.bf16 %v868, %v906
    %v939 = vmax.bf16 %v907, 0
    %v940 = vmax.bf16 %v908, 0
    %v941 = vmax.bf16 %v909, 0
    %v942 = vmax.bf16 %v910, 0
    %v943 = vmax.bf16 %v911, 0
    %v944 = vmax.bf16 %v912, 0
    %v945 = vmax.bf16 %v913, 0
    %v946 = vmax.bf16 %v914, 0
    %v947 = vmax.bf16 %v915, 0
    %v948 = vmax.bf16 %v916, 0
    %v949 = vmax.bf16 %v917, 0
    %v950 = vmax.bf16 %v918, 0
    %v951 = vmax.bf16 %v919, 0
    %v952 = vmax.bf16 %v920, 0
    %v953 = vmax.bf16 %v921, 0
    %v954 = vmax.bf16 %v922, 0
    %v955 = vmax.bf16 %v923, 0
    %v956 = vmax.bf16 %v924, 0
    %v957 = vmax.bf16 %v925, 0
    %v958 = vmax.bf16 %v926, 0
    %v959 = vmax.bf16 %v927, 0
    %v960 = vmax.bf16 %v928, 0
    %v961 = vmax.bf16 %v929, 0
    %v962 = vmax.bf16 %v930, 0
    %v963 = vmax.bf16 %v931, 0
    %v964 = vmax.bf16 %v932, 0
    %v965 = vmax.bf16 %v933, 0
    %v966 = vmax.bf16 %v934, 0
    %v967 = vmax.bf16 %v935, 0
    %v968 = vmax.bf16 %v936, 0
    %v969 = vmax.bf16 %v937, 0
    %v970 = vmax.bf16 %v938, 0
    %v971 = vld [vmem:[#allocation7] sm:$0xf]
    %v972 = vld [vmem:[#allocation7 + $0x4] sm:$0xf]
    %v973 = vld [vmem:[#allocation7 + $0x8] sm:$0xf]
    %v974 = vld [vmem:[#allocation7 + $0xc] sm:$0xf]
    %v975 = vld [vmem:[#allocation7 + $0x10] sm:$0xf]
    %v976 = vld [vmem:[#allocation7 + $0x14] sm:$0xf]
    %v977 = vld [vmem:[#allocation7 + $0x18] sm:$0xf]
    %v978 = vld [vmem:[#allocation7 + $0x1c] sm:$0xf]
    %v979 = vld [vmem:[#allocation7 + $0x20] sm:$0xf]
    %v980 = vld [vmem:[#allocation7 + $0x24] sm:$0xf]
    %v981 = vld [vmem:[#allocation7 + $0x28] sm:$0xf]
    %v982 = vld [vmem:[#allocation7 + $0x2c] sm:$0xf]
    %v983 = vld [vmem:[#allocation7 + $0x30] sm:$0xf]
    %v984 = vld [vmem:[#allocation7 + $0x34] sm:$0xf]
    %v985 = vld [vmem:[#allocation7 + $0x38] sm:$0xf]
    %v986 = vld [vmem:[#allocation7 + $0x3c] sm:$0xf]
    %v987 = vld [vmem:[#allocation7 + $0x40] sm:$0xf]
    %v988 = vld [vmem:[#allocation7 + $0x44] sm:$0xf]
    %v989 = vld [vmem:[#allocation7 + $0x48] sm:$0xf]
    %v990 = vld [vmem:[#allocation7 + $0x4c] sm:$0xf]
    %v991 = vld [vmem:[#allocation7 + $0x50] sm:$0xf]
    %v992 = vld [vmem:[#allocation7 + $0x54] sm:$0xf]
    %v993 = vld [vmem:[#allocation7 + $0x58] sm:$0xf]
    %v994 = vld [vmem:[#allocation7 + $0x5c] sm:$0xf]
    %v995 = vld [vmem:[#allocation7 + $0x60] sm:$0xf]
    %v996 = vld [vmem:[#allocation7 + $0x64] sm:$0xf]
    %v997 = vld [vmem:[#allocation7 + $0x68] sm:$0xf]
    %v998 = vld [vmem:[#allocation7 + $0x6c] sm:$0xf]
    %v999 = vld [vmem:[#allocation7 + $0x70] sm:$0xf]
    %v1000 = vld [vmem:[#allocation7 + $0x74] sm:$0xf]
    %v1001 = vld [vmem:[#allocation7 + $0x78] sm:$0xf]
    %v1002 = vld [vmem:[#allocation7 + $0x7c] sm:$0xf]
    %v1035 = vunpack.c.l.b16 %v971
    %v1036 = vunpack.c.l.b16 %v972
    %v1037 = vunpack.c.l.b16 %v973
    %v1038 = vunpack.c.l.b16 %v974
    %v1039 = vunpack.c.l.b16 %v975
    %v1040 = vunpack.c.l.b16 %v976
    %v1041 = vunpack.c.l.b16 %v977
    %v1042 = vunpack.c.l.b16 %v978
    %v1043 = vunpack.c.l.b16 %v979
    %v1044 = vunpack.c.l.b16 %v980
    %v1045 = vunpack.c.l.b16 %v981
    %v1046 = vunpack.c.l.b16 %v982
    %v1047 = vunpack.c.l.b16 %v983
    %v1048 = vunpack.c.l.b16 %v984
    %v1049 = vunpack.c.l.b16 %v985
    %v1050 = vunpack.c.l.b16 %v986
    %v1051 = vunpack.c.l.b16 %v987
    %v1052 = vunpack.c.l.b16 %v988
    %v1053 = vunpack.c.l.b16 %v989
    %v1054 = vunpack.c.l.b16 %v990
    %v1055 = vunpack.c.l.b16 %v991
    %v1056 = vunpack.c.l.b16 %v992
    %v1057 = vunpack.c.l.b16 %v993
    %v1058 = vunpack.c.l.b16 %v994
    %v1059 = vunpack.c.l.b16 %v995
    %v1060 = vunpack.c.l.b16 %v996
    %v1061 = vunpack.c.l.b16 %v997
    %v1062 = vunpack.c.l.b16 %v998
    %v1063 = vunpack.c.l.b16 %v999
    %v1064 = vunpack.c.l.b16 %v1000
    %v1065 = vunpack.c.l.b16 %v1001
    %v1066 = vunpack.c.l.b16 %v1002
    %v1067 = vpack.c.b16 %v1036, %v1035
    %v1068 = vpack.c.b16 %v1038, %v1037
    %v1069 = vpack.c.b16 %v1040, %v1039
    %v1070 = vpack.c.b16 %v1042, %v1041
    %v1071 = vpack.c.b16 %v1044, %v1043
    %v1072 = vpack.c.b16 %v1046, %v1045
    %v1073 = vpack.c.b16 %v1048, %v1047
    %v1074 = vpack.c.b16 %v1050, %v1049
    %v1075 = vpack.c.b16 %v1052, %v1051
    %v1076 = vpack.c.b16 %v1054, %v1053
    %v1077 = vpack.c.b16 %v1056, %v1055
    %v1078 = vpack.c.b16 %v1058, %v1057
    %v1079 = vpack.c.b16 %v1060, %v1059
    %v1080 = vpack.c.b16 %v1062, %v1061
    %v1081 = vpack.c.b16 %v1064, %v1063
    %v1082 = vpack.c.b16 %v1066, %v1065
    %1099 = vmatprep.subr.bf16.mxu0 0
    %1100 = vmatpush1.bf16.msra.mxu0 %v1074
    %1101 = vmatprep.subr.bf16.mxu0 0
    %1102 = vmatpush1.bf16.msra.mxu0 %v1073
    %1103 = vmatprep.subr.bf16.mxu0 0
    %1104 = vmatpush1.bf16.msra.mxu0 %v1072
    %1105 = vmatprep.subr.bf16.mxu0 0
    %1106 = vmatpush1.bf16.msra.mxu0 %v1071
    %1107 = vmatprep.subr.bf16.mxu0 0
    %1108 = vmatpush1.bf16.msra.mxu0 %v1070
    %1109 = vmatprep.subr.bf16.mxu0 0
    %1110 = vmatpush1.bf16.msra.mxu0 %v1069
    %1111 = vmatprep.subr.bf16.mxu0 0
    %1112 = vmatpush1.bf16.msra.mxu0 %v1068
    %1113 = vmatprep.subr.bf16.mxu0 0
    %1114 = vmatpush1.bf16.msra.mxu0 %v1067
    %1115 = vmatprep.subr.bf16.mxu0 0
    %1116 = vmatpush2.bf16.msra.mxu0 %v1082
    %1117 = vmatprep.subr.bf16.mxu0 0
    %1118 = vmatpush2.bf16.msra.mxu0 %v1081
    %1119 = vmatprep.subr.bf16.mxu0 0
    %1120 = vmatpush2.bf16.msra.mxu0 %v1080
    %1121 = vmatprep.subr.bf16.mxu0 0
    %1122 = vmatpush2.bf16.msra.mxu0 %v1079
    %1123 = vmatprep.subr.bf16.mxu0 0
    %1124 = vmatpush2.bf16.msra.mxu0 %v1078
    %1125 = vmatprep.subr.bf16.mxu0 0
    %1126 = vmatpush2.bf16.msra.mxu0 %v1077
    %1127 = vmatprep.subr.bf16.mxu0 0
    %1128 = vmatpush2.bf16.msra.mxu0 %v1076
    %1129 = vmatprep.subr.bf16.mxu0 0
    %1130 = vmatpush2.bf16.msra.mxu0 %v1075
    %1131 = vmatprep.mubr.bf16.mxu0 %v940
    %1132 = vmatmul.mubr.bf16.gmra.mxu0 %v939
    %v1133 = vpop.f32.mrf.mxu0
    %v1134 = vadd.f32 0.0, %v1133
    %v1135 = vpop.f32.mrf.mxu0
    %v1136 = vpop.f32.mrf.mxu0
    %v1137 = vadd.f32 0.0, %v1136
    %v1138 = vpop.f32.mrf.mxu0
    %1139 = vmatprep.mubr.bf16.mxu0 %v942
    %1140 = vmatmul.mubr.bf16.gmra.mxu0 %v941
    %v1141 = vpop.f32.mrf.mxu0
    %v1142 = vadd.f32 0.0, %v1141
    %v1143 = vpop.f32.mrf.mxu0
    %v1144 = vpop.f32.mrf.mxu0
    %v1145 = vadd.f32 0.0, %v1144
    %v1146 = vpop.f32.mrf.mxu0
    %1147 = vmatprep.mubr.bf16.mxu0 %v944
    %1148 = vmatmul.mubr.bf16.gmra.mxu0 %v943
    %v1149 = vpop.f32.mrf.mxu0
    %v1150 = vadd.f32 0.0, %v1149
    %v1151 = vpop.f32.mrf.mxu0
    %v1152 = vpop.f32.mrf.mxu0
    %v1153 = vadd.f32 0.0, %v1152
    %v1154 = vpop.f32.mrf.mxu0
    %1155 = vmatprep.mubr.bf16.mxu0 %v946
    %1156 = vmatmul.mubr.bf16.gmra.mxu0 %v945
    %v1157 = vpop.f32.mrf.mxu0
    %v1158 = vadd.f32 0.0, %v1157
    %v1159 = vpop.f32.mrf.mxu0
    %v1160 = vpop.f32.mrf.mxu0
    %v1161 = vadd.f32 0.0, %v1160
    %v1162 = vpop.f32.mrf.mxu0
    %1163 = vmatprep.mubr.bf16.mxu0 %v948
    %1164 = vmatmul.mubr.bf16.gmra.mxu0 %v947
    %v1165 = vpop.f32.mrf.mxu0
    %v1166 = vadd.f32 0.0, %v1165
    %v1167 = vpop.f32.mrf.mxu0
    %v1168 = vpop.f32.mrf.mxu0
    %v1169 = vadd.f32 0.0, %v1168
    %v1170 = vpop.f32.mrf.mxu0
    %1171 = vmatprep.mubr.bf16.mxu0 %v950
    %1172 = vmatmul.mubr.bf16.gmra.mxu0 %v949
    %v1173 = vpop.f32.mrf.mxu0
    %v1174 = vadd.f32 0.0, %v1173
    %v1175 = vpop.f32.mrf.mxu0
    %v1176 = vpop.f32.mrf.mxu0
    %v1177 = vadd.f32 0.0, %v1176
    %v1178 = vpop.f32.mrf.mxu0
    %1179 = vmatprep.mubr.bf16.mxu0 %v952
    %1180 = vmatmul.mubr.bf16.gmra.mxu0 %v951
    %v1181 = vpop.f32.mrf.mxu0
    %v1182 = vadd.f32 0.0, %v1181
    %v1183 = vpop.f32.mrf.mxu0
    %v1184 = vpop.f32.mrf.mxu0
    %v1185 = vadd.f32 0.0, %v1184
    %v1186 = vpop.f32.mrf.mxu0
    %1187 = vmatprep.mubr.bf16.mxu0 %v954
    %1188 = vmatmul.mubr.bf16.gmra.mxu0 %v953
    %v1189 = vpop.f32.mrf.mxu0
    %v1190 = vadd.f32 0.0, %v1189
    %v1191 = vpop.f32.mrf.mxu0
    %v1192 = vpop.f32.mrf.mxu0
    %v1193 = vadd.f32 0.0, %v1192
    %v1194 = vpop.f32.mrf.mxu0
    %1195 = vmatprep.mubr.bf16.mxu0 %v956
    %1196 = vmatmul.mubr.bf16.gmra.mxu0 %v955
    %v1197 = vpop.f32.mrf.mxu0
    %v1198 = vadd.f32 0.0, %v1197
    %v1199 = vpop.f32.mrf.mxu0
    %v1200 = vpop.f32.mrf.mxu0
    %v1201 = vadd.f32 0.0, %v1200
    %v1202 = vpop.f32.mrf.mxu0
    %1203 = vmatprep.mubr.bf16.mxu0 %v958
    %1204 = vmatmul.mubr.bf16.gmra.mxu0 %v957
    %v1205 = vpop.f32.mrf.mxu0
    %v1206 = vadd.f32 0.0, %v1205
    %v1207 = vpop.f32.mrf.mxu0
    %v1208 = vpop.f32.mrf.mxu0
    %v1209 = vadd.f32 0.0, %v1208
    %v1210 = vpop.f32.mrf.mxu0
    %1211 = vmatprep.mubr.bf16.mxu0 %v960
    %1212 = vmatmul.mubr.bf16.gmra.mxu0 %v959
    %v1213 = vpop.f32.mrf.mxu0
    %v1214 = vadd.f32 0.0, %v1213
    %v1215 = vpop.f32.mrf.mxu0
    %v1216 = vpop.f32.mrf.mxu0
    %v1217 = vadd.f32 0.0, %v1216
    %v1218 = vpop.f32.mrf.mxu0
    %1219 = vmatprep.mubr.bf16.mxu0 %v962
    %1220 = vmatmul.mubr.bf16.gmra.mxu0 %v961
    %v1221 = vpop.f32.mrf.mxu0
    %v1222 = vadd.f32 0.0, %v1221
    %v1223 = vpop.f32.mrf.mxu0
    %v1224 = vpop.f32.mrf.mxu0
    %v1225 = vadd.f32 0.0, %v1224
    %v1226 = vpop.f32.mrf.mxu0
    %1227 = vmatprep.mubr.bf16.mxu0 %v964
    %1228 = vmatmul.mubr.bf16.gmra.mxu0 %v963
    %v1229 = vpop.f32.mrf.mxu0
    %v1230 = vadd.f32 0.0, %v1229
    %v1231 = vpop.f32.mrf.mxu0
    %v1232 = vpop.f32.mrf.mxu0
    %v1233 = vadd.f32 0.0, %v1232
    %v1234 = vpop.f32.mrf.mxu0
    %1235 = vmatprep.mubr.bf16.mxu0 %v966
    %1236 = vmatmul.mubr.bf16.gmra.mxu0 %v965
    %v1237 = vpop.f32.mrf.mxu0
    %v1238 = vadd.f32 0.0, %v1237
    %v1239 = vpop.f32.mrf.mxu0
    %v1240 = vpop.f32.mrf.mxu0
    %v1241 = vadd.f32 0.0, %v1240
    %v1242 = vpop.f32.mrf.mxu0
    %1243 = vmatprep.mubr.bf16.mxu0 %v968
    %1244 = vmatmul.mubr.bf16.gmra.mxu0 %v967
    %v1245 = vpop.f32.mrf.mxu0
    %v1246 = vadd.f32 0.0, %v1245
    %v1247 = vpop.f32.mrf.mxu0
    %v1248 = vpop.f32.mrf.mxu0
    %v1249 = vadd.f32 0.0, %v1248
    %v1250 = vpop.f32.mrf.mxu0
    %1251 = vmatprep.mubr.bf16.mxu0 %v970
    %1252 = vmatmul.mubr.bf16.gmra.mxu0 %v969
    %v1253 = vpop.f32.mrf.mxu0
    %v1254 = vadd.f32 0.0, %v1253
    %v1255 = vpop.f32.mrf.mxu0
    %v1256 = vpop.f32.mrf.mxu0
    %v1257 = vadd.f32 0.0, %v1256
    %v1258 = vpop.f32.mrf.mxu0
    %1259 = vdwg.mxu0
    %v1260 = vadd.f32 %v69, %v1134
    %v1261 = vadd.f32 %v70, %v1137
    %v1262 = vadd.f32 %v71, %v1142
    %v1263 = vadd.f32 %v72, %v1145
    %v1264 = vadd.f32 %v73, %v1150
    %v1265 = vadd.f32 %v74, %v1153
    %v1266 = vadd.f32 %v75, %v1158
    %v1267 = vadd.f32 %v76, %v1161
    %v1268 = vadd.f32 %v77, %v1166
    %v1269 = vadd.f32 %v78, %v1169
    %v1270 = vadd.f32 %v79, %v1174
    %v1271 = vadd.f32 %v80, %v1177
    %v1272 = vadd.f32 %v81, %v1182
    %v1273 = vadd.f32 %v82, %v1185
    %v1274 = vadd.f32 %v83, %v1190
    %v1275 = vadd.f32 %v84, %v1193
    %v1276 = vadd.f32 %v85, %v1198
    %v1277 = vadd.f32 %v86, %v1201
    %v1278 = vadd.f32 %v87, %v1206
    %v1279 = vadd.f32 %v88, %v1209
    %v1280 = vadd.f32 %v89, %v1214
    %v1281 = vadd.f32 %v90, %v1217
    %v1282 = vadd.f32 %v91, %v1222
    %v1283 = vadd.f32 %v92, %v1225
    %v1284 = vadd.f32 %v93, %v1230
    %v1285 = vadd.f32 %v94, %v1233
    %v1286 = vadd.f32 %v95, %v1238
    %v1287 = vadd.f32 %v96, %v1241
    %v1288 = vadd.f32 %v97, %v1246
    %v1289 = vadd.f32 %v98, %v1249
    %v1290 = vadd.f32 %v99, %v1254
    %v1291 = vadd.f32 %v100, %v1257
    %v1292 = vld [vmem:[%s4] sm:$0x1]
    %v1294 = vlaneseq
    %v1295 = vshrl.u32 %v1294, 7
    %v1296 = vsub.s32 0, %v1295
    %v1297 = vrot.slane %v1292, %v1296
    %v1299 = vadd.f32 %v1260, %v1297
    %v1300 = vadd.f32 %v1261, %v1297
    %v1301 = vadd.f32 %v1262, %v1297
    %v1302 = vadd.f32 %v1263, %v1297
    %v1303 = vadd.f32 %v1264, %v1297
    %v1304 = vadd.f32 %v1265, %v1297
    %v1305 = vadd.f32 %v1266, %v1297
    %v1306 = vadd.f32 %v1267, %v1297
    %v1307 = vadd.f32 %v1268, %v1297
    %v1308 = vadd.f32 %v1269, %v1297
    %v1309 = vadd.f32 %v1270, %v1297
    %v1310 = vadd.f32 %v1271, %v1297
    %v1311 = vadd.f32 %v1272, %v1297
    %v1312 = vadd.f32 %v1273, %v1297
    %v1313 = vadd.f32 %v1274, %v1297
    %v1314 = vadd.f32 %v1275, %v1297
    %v1315 = vadd.f32 %v1276, %v1297
    %v1316 = vadd.f32 %v1277, %v1297
    %v1317 = vadd.f32 %v1278, %v1297
    %v1318 = vadd.f32 %v1279, %v1297
    %v1319 = vadd.f32 %v1280, %v1297
    %v1320 = vadd.f32 %v1281, %v1297
    %v1321 = vadd.f32 %v1282, %v1297
    %v1322 = vadd.f32 %v1283, %v1297
    %v1323 = vadd.f32 %v1284, %v1297
    %v1324 = vadd.f32 %v1285, %v1297
    %v1325 = vadd.f32 %v1286, %v1297
    %v1326 = vadd.f32 %v1287, %v1297
    %v1327 = vadd.f32 %v1288, %v1297
    %v1328 = vadd.f32 %v1289, %v1297
    %v1329 = vadd.f32 %v1290, %v1297
    %v1330 = vadd.f32 %v1291, %v1297
    %1331 = vst [vmem:[#allocation8] sm:$0xff] %v1299
    %1332 = vst [vmem:[#allocation8 + $0x8] sm:$0xff] %v1300
    %1333 = vst [vmem:[#allocation8 + $0x10] sm:$0xff] %v1301
    %1334 = vst [vmem:[#allocation8 + $0x18] sm:$0xff] %v1302
    %1335 = vst [vmem:[#allocation8 + $0x20] sm:$0xff] %v1303
    %1336 = vst [vmem:[#allocation8 + $0x28] sm:$0xff] %v1304
    %1337 = vst [vmem:[#allocation8 + $0x30] sm:$0xff] %v1305
    %1338 = vst [vmem:[#allocation8 + $0x38] sm:$0xff] %v1306
    %1339 = vst [vmem:[#allocation8 + $0x40] sm:$0xff] %v1307
    %1340 = vst [vmem:[#allocation8 + $0x48] sm:$0xff] %v1308
    %1341 = vst [vmem:[#allocation8 + $0x50] sm:$0xff] %v1309
    %1342 = vst [vmem:[#allocation8 + $0x58] sm:$0xff] %v1310
    %1343 = vst [vmem:[#allocation8 + $0x60] sm:$0xff] %v1311
    %1344 = vst [vmem:[#allocation8 + $0x68] sm:$0xff] %v1312
    %1345 = vst [vmem:[#allocation8 + $0x70] sm:$0xff] %v1313
    %1346 = vst [vmem:[#allocation8 + $0x78] sm:$0xff] %v1314
    %1347 = vst [vmem:[#allocation8 + $0x80] sm:$0xff] %v1315
    %1348 = vst [vmem:[#allocation8 + $0x88] sm:$0xff] %v1316
    %1349 = vst [vmem:[#allocation8 + $0x90] sm:$0xff] %v1317
    %1350 = vst [vmem:[#allocation8 + $0x98] sm:$0xff] %v1318
    %1351 = vst [vmem:[#allocation8 + $0xa0] sm:$0xff] %v1319
    %1352 = vst [vmem:[#allocation8 + $0xa8] sm:$0xff] %v1320
    %1353 = vst [vmem:[#allocation8 + $0xb0] sm:$0xff] %v1321
    %1354 = vst [vmem:[#allocation8 + $0xb8] sm:$0xff] %v1322
    %1355 = vst [vmem:[#allocation8 + $0xc0] sm:$0xff] %v1323
    %1356 = vst [vmem:[#allocation8 + $0xc8] sm:$0xff] %v1324
    %1357 = vst [vmem:[#allocation8 + $0xd0] sm:$0xff] %v1325
    %1358 = vst [vmem:[#allocation8 + $0xd8] sm:$0xff] %v1326
    %1359 = vst [vmem:[#allocation8 + $0xe0] sm:$0xff] %v1327
    %1360 = vst [vmem:[#allocation8 + $0xe8] sm:$0xff] %v1328
    %1361 = vst [vmem:[#allocation8 + $0xf0] sm:$0xff] %v1329
    %1362 = vst [vmem:[#allocation8 + $0xf8] sm:$0xff] %v1330
    // Predicated region
    $region42: #{tpu_custom_call.1} parent=1 // pred_check
      _
    $region43: #{tpu_custom_call.1} parent=1 // pred_check_branch
      %1364 = sbr.rel (0) target = $region45
    $region44: #{tpu_custom_call.1} parent=1 // pred_region
      %s1366 = ssub.s32 4096, 4096
      %1367 = vsyncadd [#allocation4], %s1366
      %s1368 = sshll.u32 [#allocation8], 4
      %s1369 = int_to_ptr.vmem [resolvable:$true] %s1368
      %1374 = dma.vmem_to_hbm [thread:$0]  %s1369, 4096, %s7, [#allocation4], 128, 128, 8
    $region45: #{tpu_custom_call.1} parent=1 // pred_fallthru
      _
    // Predicated region
    $region46: #{tpu_custom_call.1} parent=1 // pred_check
      _
    $region47: #{tpu_custom_call.1} parent=1 // pred_check_branch
      %1376 = sbr.rel (0) target = $region49
    $region48: #{tpu_custom_call.1} parent=1 // pred_region
      %1377 = dma.done [#allocation4], 4096
    $region49: #{tpu_custom_call.1} parent=1 // pred_fallthru
      _
    %1378 = vsyncpa [#allocation3], 1
    %1379 = vsyncpa [#allocation6], 1
    %1380 = vsyncpa [#allocation4], 1

</llo_original>
